<compile_context>
chip_gen: v7x
topology: tpu7x:2x2x1
jax: 0.10.0
libtpu: 0.0.40
codegen_flags: <defaults>
</compile_context>

<pallas_src>
import functools
import math

import jax
import jax.numpy as jnp
from jax import lax
from jax.experimental import pallas as pl
from jax.experimental.pallas import tpu as pltpu

LANE = 128
SUBLANE = 8
NEG_BIG = -1e30   # finite "minus infinity"


def _round_up(x, m):
    return (x + m - 1) // m * m


def _non_local_flash_kernel(xq_ref, xk_ref, w_ref, b_ref, z_ref,
                            m_sc, l_sc, acc_sc, *, n_valid, masked):
    kv = pl.program_id(2)

    @pl.when(kv == 0)
    def _():
        m_sc[...] = jnp.full(m_sc.shape, NEG_BIG, m_sc.dtype)
        l_sc[...] = jnp.zeros(l_sc.shape, l_sc.dtype)
        acc_sc[...] = jnp.zeros(acc_sc.shape, acc_sc.dtype)

    xq = xq_ref[...]                       # (Cp, tq), input dtype
    xk = xk_ref[...]                       # (Cp, tk), input dtype

    # s[j, i] = sum_c xk[c, j] * xq[c, i]  -> kv positions on sublanes, q on lanes.
    s = lax.dot_general(xk, xq, (((0,), (0,)), ((), ())),
                        preferred_element_type=jnp.float32)        # (tk, tq) f32

    if masked:  # static flag: only emitted when N had to be padded along the kv axis
        tk_blk = s.shape[0]
        row = kv * tk_blk + lax.broadcasted_iota(jnp.int32, s.shape, 0)
        s = jnp.where(row < n_valid, s, NEG_BIG)

    # online softmax over the kv (sublane) axis
    m_prev = m_sc[...]                                              # (1, tq)
    m_new = jnp.maximum(m_prev, jnp.max(s, axis=0, keepdims=True))
    alpha = jnp.exp(m_prev - m_new)
    p = jnp.exp(s - m_new)                                          # (tk, tq) f32
    l_sc[...] = alpha * l_sc[...] + jnp.sum(p, axis=0, keepdims=True)
    acc_sc[...] = alpha * acc_sc[...] + jnp.dot(
        xk, p.astype(xk.dtype), preferred_element_type=jnp.float32)  # (Cp, tq) f32
    m_sc[...] = m_new

    @pl.when(kv == pl.num_programs(2) - 1)
    def _():
        y_t = acc_sc[...] / l_sc[...]                               # (Cp, tq) f32
        # 1x1 conv == per-location linear map: z = W @ y + b, then residual.
        wy = jnp.dot(w_ref[...], y_t.astype(w_ref.dtype),
                     preferred_element_type=jnp.float32)            # (Cp, tq) f32
        z = wy + b_ref[...].astype(jnp.float32) + xq.astype(jnp.float32)
        z_ref[...] = z.astype(z_ref.dtype)


def block_non_local(x_nchw, w_conv, b_conv, *, tq=256, tk=256):
    """Non-local block.  x: (B, C, H, W); w_conv: (C_out=C, C_in=C); b_conv: (C,).

    tq/tk: tile sizes along N = H*W (kept multiples of 128).  256 matches the
    256x256 MXU of v6e/v7x and amortizes per-grid-step overhead; 512 can pay off
    for very large N with modest C (mind the VMEM budget on v7x).
    """
    B, C, H, W = x_nchw.shape
    N = H * W
    Cp = _round_up(C, SUBLANE)                  # sublane padding only (NOT to 128)

    Np0 = _round_up(N, LANE)
    tq = max(LANE, (min(tq, Np0) // LANE) * LANE)
    tk = max(LANE, (min(tk, Np0) // LANE) * LANE)
    # v7x shards the "parallel" grid axes over 2 TensorCores; if batch alone can't
    # feed both, split the q axis.
    if B * (Np0 // tq) < 2 and Np0 >= 2 * LANE:
        tq = max(LANE, ((Np0 // 2) // LANE) * LANE)
    Np = _round_up(N, math.lcm(tq, tk))

    # glue (cheap): NCHW -> (B, C, N) is a pure reshape; pads are zero-width (no-ops)
    # whenever C is a multiple of 8 and N a multiple of the tile.
    x_bcn = x_nchw.reshape(B, C, N)
    x_p = jnp.pad(x_bcn, ((0, 0), (0, Cp - C), (0, Np - N)))
    w_p = jnp.pad(w_conv, ((0, Cp - C), (0, Cp - C)))               # (Cout_p, Cin_p)
    b_p = jnp.pad(b_conv, (0, Cp - C)).reshape(Cp, 1)

    # VMEM budget: double-buffered blocks + f32 scratch + in-kernel temporaries.
    itemsize = jnp.dtype(x_p.dtype).itemsize
    vmem_need = (2 * Cp * tq * itemsize          # xq blocks
                 + 2 * Cp * tk * itemsize        # xk blocks
                 + 2 * Cp * Cp * itemsize        # weight (resident, still 2 buffers)
                 + 2 * Cp * itemsize             # bias
                 + 2 * Cp * tq * itemsize        # output blocks
                 + (Cp * tq + 2 * tq) * 4        # acc / m / l scratch (f32)
                 + 3 * tk * tq * 4)              # s, p, iota temporaries (f32)
    # cap at 48 MiB: inside v7x's 64 MiB physical VMEM; v5e/v6e have 128 MiB.
    vmem_limit = int(min(max(2 * vmem_need, 32 * 1024 * 1024), 48 * 1024 * 1024))

    kernel = functools.partial(_non_local_flash_kernel,
                               n_valid=N, masked=(Np != N))

    out = pl.pallas_call(
        kernel,
        out_shape=jax.ShapeDtypeStruct((B, Cp, Np), x_p.dtype),
        grid_spec=pltpu.PrefetchScalarGridSpec(
            num_scalar_prefetch=0,
            grid=(B, Np // tq, Np // tk),
            in_specs=[
                # query tile: constant block across the kv axis -> fetched once per q tile
                pl.BlockSpec((None, Cp, tq), lambda b, qi, ki: (b, 0, qi)),
                # key/value tile: streams along the kv axis
                pl.BlockSpec((None, Cp, tk), lambda b, qi, ki: (b, 0, ki)),
                # 1x1-conv weight / bias: constant block index -> resident for the grid.
                # TODO(synk): pipeline_mode=pl.Buffered(1) would drop their second VMEM
                # buffer (matters only for large C); left default for compile safety.
                pl.BlockSpec((Cp, Cp), lambda b, qi, ki: (0, 0)),
                pl.BlockSpec((Cp, 1), lambda b, qi, ki: (0, 0)),
            ],
            out_specs=pl.BlockSpec((None, Cp, tq), lambda b, qi, ki: (b, 0, qi)),
            scratch_shapes=[
                pltpu.VMEM((1, tq), jnp.float32),    # running max
                pltpu.VMEM((1, tq), jnp.float32),    # running sum
                pltpu.VMEM((Cp, tq), jnp.float32),   # y^T accumulator
            ],
        ),
        compiler_params=pltpu.CompilerParams(
            dimension_semantics=("parallel", "parallel", "arbitrary"),
            vmem_limit_bytes=vmem_limit),
    )(x_p, x_p, w_p, b_p)

    # strip padding; (B, C, N) is already NCHW order, so this is just a reshape.
    return out[:, :C, :N].reshape(B, C, H, W)


def _reference(x, w, b):
    B, C, H, W = x.shape
    N = H * W
    xf = x.reshape(B, C, N)
    g_x = jnp.transpose(xf, (0, 2, 1))                      # (B, N, C)
    f = jnp.einsum('bnc,bcm->bnm', g_x, xf)                 # (B, N, N)
    p = jax.nn.softmax(f, axis=-1)
    y = jnp.einsum('bnm,bmc->bnc', p, g_x)                  # (B, N, C)
    y = jnp.transpose(y, (0, 2, 1)).reshape(B, C, H, W)
    wy = jnp.einsum('oc,bchw->bohw', w, y) + b[None, :, None, None]
    return wy + x


if __name__ == "__main__":
    key = jax.random.PRNGKey(0)
    kx, kw, kb, kx2 = jax.random.split(key, 4)

    # case 1: divisible shapes (B=2, C=4, H=W=16 -> N=256)
    B, C, H, W = 2, 4, 16, 16
    x = jax.random.normal(kx, (B, C, H, W), dtype=jnp.float32)
    w_conv = 0.1 * jax.random.normal(kw, (C, C), dtype=jnp.float32)
    b_conv = 0.01 * jax.random.normal(kb, (C,), dtype=jnp.float32)

    z = block_non_local(x, w_conv, b_conv)                  # default 256 tiles
    jax.block_until_ready(z)
    z_ref = _reference(x, w_conv, b_conv)
    assert z.shape == (B, C, H, W)
    assert jnp.allclose(z, z_ref, atol=2e-4, rtol=2e-4), "mismatch vs reference (case 1)"

    # case 1b: small tiles -> exercises the multi-step online-softmax path
    z_s = block_non_local(x, w_conv, b_conv, tq=128, tk=128)
    jax.block_until_ready(z_s)
    assert jnp.allclose(z_s, z_ref, atol=2e-4, rtol=2e-4), "mismatch vs reference (case 1b)"

    # case 2: non-divisible spatial size -> exercises the padded/masked kv path
    H2, W2 = 10, 10
    x2 = jax.random.normal(kx2, (B, C, H2, W2), dtype=jnp.float32)
    z2 = block_non_local(x2, w_conv, b_conv)
    jax.block_until_ready(z2)
    z2_ref = _reference(x2, w_conv, b_conv)
    assert z2.shape == (B, C, H2, W2)
    assert jnp.allclose(z2, z2_ref, atol=2e-4, rtol=2e-4), "mismatch vs reference (case 2)"

    print("KERNEL_OK")
</pallas_src>

<mosaic_0001>
module attributes {stable_mosaic.version = 11 : i64} {
  func.func @_non_local_flash_kernel(%arg0: i32, %arg1: i32, %arg2: i32, %arg3: memref<1x8x256xf32, #tpu.memory_space<vmem>>, %arg4: memref<1x8x256xf32, #tpu.memory_space<vmem>>, %arg5: memref<8x8xf32, #tpu.memory_space<vmem>>, %arg6: memref<8x1xf32, #tpu.memory_space<vmem>>, %arg7: memref<1x8x256xf32, #tpu.memory_space<vmem>>, %arg8: memref<1x256xf32, #tpu.memory_space<vmem>>, %arg9: memref<1x256xf32, #tpu.memory_space<vmem>>, %arg10: memref<8x256xf32, #tpu.memory_space<vmem>>) attributes {dimension_semantics = [#tpu.dimension_semantics<parallel>, #tpu.dimension_semantics<parallel>, #tpu.dimension_semantics<arbitrary>], iteration_bounds = array<i64: 2, 1, 1>, scalar_prefetch = 0 : i64, scratch_operands = 3 : i64, tpu.core_type = #tpu.core_type<tc>, window_params = [{transform_indices = @transform_0, window_bounds = array<i64: 1, 8, 256>}, {transform_indices = @transform_1, window_bounds = array<i64: 1, 8, 256>}, {pipeline_mode = #tpu.pipeline_mode<synchronous>, transform_indices = @transform_2, window_bounds = array<i64: 8, 8>}, {pipeline_mode = #tpu.pipeline_mode<synchronous>, transform_indices = @transform_3, window_bounds = array<i64: 8, 1>}, {transform_indices = @transform_4, window_bounds = array<i64: 1, 8, 256>}]} {
    %c0_i32 = arith.constant 0 : i32
    %0 = arith.cmpi eq, %arg2, %c0_i32 : i32
    %1 = arith.extui %0 : i1 to i32
    %c0_i32_0 = arith.constant 0 : i32
    %2 = arith.cmpi ne, %1, %c0_i32_0 : i32
    scf.if %2 {
      %cst_23 = arith.constant -1.000000e+30 : f32
      %33 = vector.broadcast %cst_23 : f32 to vector<1x256xf32>
      %c0_24 = arith.constant 0 : index
      %c0_25 = arith.constant 0 : index
      %34 = vector.load %arg8[%c0_24, %c0_25] : memref<1x256xf32, #tpu.memory_space<vmem>>, vector<1x256xf32>
      tpu.vector_store %arg8[%c0_24, %c0_25], %33 {strides = array<i32>} : memref<1x256xf32, #tpu.memory_space<vmem>>, vector<1x256xf32>,
      %cst_26 = arith.constant 0.000000e+00 : f32
      %35 = vector.broadcast %cst_26 : f32 to vector<1x256xf32>
      %c0_27 = arith.constant 0 : index
      %c0_28 = arith.constant 0 : index
      %36 = vector.load %arg9[%c0_27, %c0_28] : memref<1x256xf32, #tpu.memory_space<vmem>>, vector<1x256xf32>
      tpu.vector_store %arg9[%c0_27, %c0_28], %35 {strides = array<i32>} : memref<1x256xf32, #tpu.memory_space<vmem>>, vector<1x256xf32>,
      %cst_29 = arith.constant 0.000000e+00 : f32
      %37 = vector.broadcast %cst_29 : f32 to vector<8x256xf32>
      %c0_30 = arith.constant 0 : index
      %c0_31 = arith.constant 0 : index
      %38 = vector.load %arg10[%c0_30, %c0_31] : memref<8x256xf32, #tpu.memory_space<vmem>>, vector<8x256xf32>
      tpu.vector_store %arg10[%c0_30, %c0_31], %37 {strides = array<i32>} : memref<8x256xf32, #tpu.memory_space<vmem>>, vector<8x256xf32>,
    } else {
    }
    %c0 = arith.constant 0 : index
    %c0_1 = arith.constant 0 : index
    %c0_2 = arith.constant 0 : index
    %3 = vector.load %arg3[%c0, %c0_1, %c0_2] : memref<1x8x256xf32, #tpu.memory_space<vmem>>, vector<1x8x256xf32>
    %4 = vector.shape_cast %3 : vector<1x8x256xf32> to vector<8x256xf32>
    %c0_3 = arith.constant 0 : index
    %c0_4 = arith.constant 0 : index
    %c0_5 = arith.constant 0 : index
    %5 = vector.load %arg4[%c0_3, %c0_4, %c0_5] : memref<1x8x256xf32, #tpu.memory_space<vmem>>, vector<1x8x256xf32>
    %6 = vector.shape_cast %5 : vector<1x8x256xf32> to vector<8x256xf32>
    %cst = arith.constant dense<0.000000e+00> : vector<256x256xf32>
    %7 = tpu.matmul %6, %4, %cst {dimension_numbers = #tpu.dot_dimension_numbers<[0], [0], [1], [1], [0, 1, 1, 1], [], []>} : vector<8x256xf32>, vector<8x256xf32>, vector<256x256xf32> -> vector<256x256xf32>
    %c0_6 = arith.constant 0 : index
    %c0_7 = arith.constant 0 : index
    %8 = vector.load %arg8[%c0_6, %c0_7] : memref<1x256xf32, #tpu.memory_space<vmem>>, vector<1x256xf32>
    %cst_8 = arith.constant dense<0xFF800000> : vector<256xf32>
    %9 = vector.multi_reduction <maximumf>, %7, %cst_8 [0] : vector<256x256xf32> to vector<256xf32>
    %10 = vector.shape_cast %9 : vector<256xf32> to vector<1x256xf32>
    %11 = arith.maximumf %8, %10 : vector<1x256xf32>
    %12 = arith.subf %8, %11 : vector<1x256xf32>
    %13 = math.exp %12 : vector<1x256xf32>
    %14 = vector.broadcast %11 : vector<1x256xf32> to vector<256x256xf32>
    %15 = arith.subf %7, %14 : vector<256x256xf32>
    %16 = math.exp %15 : vector<256x256xf32>
    %c0_9 = arith.constant 0 : index
    %c0_10 = arith.constant 0 : index
    %17 = vector.load %arg9[%c0_9, %c0_10] : memref<1x256xf32, #tpu.memory_space<vmem>>, vector<1x256xf32>
    %18 = arith.mulf %13, %17 : vector<1x256xf32>
    %cst_11 = arith.constant dense<0.000000e+00> : vector<256xf32>
    %19 = vector.multi_reduction <add>, %16, %cst_11 [0] : vector<256x256xf32> to vector<256xf32>
    %20 = vector.shape_cast %19 : vector<256xf32> to vector<1x256xf32>
    %21 = arith.addf %18, %20 : vector<1x256xf32>
    %c0_12 = arith.constant 0 : index
    %c0_13 = arith.constant 0 : index
    %22 = vector.load %arg9[%c0_12, %c0_13] : memref<1x256xf32, #tpu.memory_space<vmem>>, vector<1x256xf32>
    tpu.vector_store %arg9[%c0_12, %c0_13], %21 {strides = array<i32>} : memref<1x256xf32, #tpu.memory_space<vmem>>, vector<1x256xf32>,
    %c0_14 = arith.constant 0 : index
    %c0_15 = arith.constant 0 : index
    %23 = vector.load %arg10[%c0_14, %c0_15] : memref<8x256xf32, #tpu.memory_space<vmem>>, vector<8x256xf32>
    %24 = vector.broadcast %13 : vector<1x256xf32> to vector<8x256xf32>
    %25 = arith.mulf %24, %23 : vector<8x256xf32>
    %cst_16 = arith.constant dense<0.000000e+00> : vector<8x256xf32>
    %26 = tpu.matmul %6, %16, %cst_16 {dimension_numbers = #tpu.dot_dimension_numbers<[1], [0], [0], [1], [0, 0, 1, 1], [], []>} : vector<8x256xf32>, vector<256x256xf32>, vector<8x256xf32> -> vector<8x256xf32>
    %27 = arith.addf %25, %26 : vector<8x256xf32>
    %c0_17 = arith.constant 0 : index
    %c0_18 = arith.constant 0 : index
    %28 = vector.load %arg10[%c0_17, %c0_18] : memref<8x256xf32, #tpu.memory_space<vmem>>, vector<8x256xf32>
    tpu.vector_store %arg10[%c0_17, %c0_18], %27 {strides = array<i32>} : memref<8x256xf32, #tpu.memory_space<vmem>>, vector<8x256xf32>,
    %c0_19 = arith.constant 0 : index
    %c0_20 = arith.constant 0 : index
    %29 = vector.load %arg8[%c0_19, %c0_20] : memref<1x256xf32, #tpu.memory_space<vmem>>, vector<1x256xf32>
    tpu.vector_store %arg8[%c0_19, %c0_20], %11 {strides = array<i32>} : memref<1x256xf32, #tpu.memory_space<vmem>>, vector<1x256xf32>,
    %c0_i32_21 = arith.constant 0 : i32
    %30 = arith.cmpi eq, %arg2, %c0_i32_21 : i32
    %31 = arith.extui %30 : i1 to i32
    %c0_i32_22 = arith.constant 0 : i32
    %32 = arith.cmpi ne, %31, %c0_i32_22 : i32
    scf.if %32 {
      %c0_23 = arith.constant 0 : index
      %c0_24 = arith.constant 0 : index
      %33 = vector.load %arg10[%c0_23, %c0_24] : memref<8x256xf32, #tpu.memory_space<vmem>>, vector<8x256xf32>
      %c0_25 = arith.constant 0 : index
      %c0_26 = arith.constant 0 : index
      %34 = vector.load %arg9[%c0_25, %c0_26] : memref<1x256xf32, #tpu.memory_space<vmem>>, vector<1x256xf32>
      %35 = vector.broadcast %34 : vector<1x256xf32> to vector<8x256xf32>
      %36 = arith.divf %33, %35 : vector<8x256xf32>
      %c0_27 = arith.constant 0 : index
      %c0_28 = arith.constant 0 : index
      %37 = vector.load %arg5[%c0_27, %c0_28] : memref<8x8xf32, #tpu.memory_space<vmem>>, vector<8x8xf32>
      %cst_29 = arith.constant dense<0.000000e+00> : vector<8x256xf32>
      %38 = tpu.matmul %37, %36, %cst_29 {dimension_numbers = #tpu.dot_dimension_numbers<[1], [0], [0], [1], [0, 0, 1, 1], [], []>} : vector<8x8xf32>, vector<8x256xf32>, vector<8x256xf32> -> vector<8x256xf32>
      %c0_30 = arith.constant 0 : index
      %c0_31 = arith.constant 0 : index
      %39 = vector.load %arg6[%c0_30, %c0_31] : memref<8x1xf32, #tpu.memory_space<vmem>>, vector<8x1xf32>
      %40 = vector.broadcast %39 : vector<8x1xf32> to vector<8x256xf32>
      %41 = arith.addf %38, %40 : vector<8x256xf32>
      %42 = arith.addf %41, %4 : vector<8x256xf32>
      %c0_32 = arith.constant 0 : index
      %c0_33 = arith.constant 0 : index
      %c0_34 = arith.constant 0 : index
      %43 = vector.load %arg7[%c0_32, %c0_33, %c0_34] : memref<1x8x256xf32, #tpu.memory_space<vmem>>, vector<1x8x256xf32>
      %44 = vector.shape_cast %43 : vector<1x8x256xf32> to vector<8x256xf32>
      %45 = vector.shape_cast %42 : vector<8x256xf32> to vector<1x8x256xf32>
      tpu.vector_store %arg7[%c0_32, %c0_33, %c0_34], %45 {strides = array<i32>} : memref<1x8x256xf32, #tpu.memory_space<vmem>>, vector<1x8x256xf32>,
    } else {
    }
    return
  }
  func.func @transform_0(%arg0: i32, %arg1: i32, %arg2: i32) -> (i32, i32, i32) {
    %c0_i32 = arith.constant 0 : i32
    %c0_i32_0 = arith.constant 0 : i32
    return %arg0, %c0_i32, %arg1 : i32, i32, i32
  }
  func.func @transform_1(%arg0: i32, %arg1: i32, %arg2: i32) -> (i32, i32, i32) {
    %c0_i32 = arith.constant 0 : i32
    %c0_i32_0 = arith.constant 0 : i32
    return %arg0, %c0_i32, %arg2 : i32, i32, i32
  }
  func.func @transform_2(%arg0: i32, %arg1: i32, %arg2: i32) -> (i32, i32) {
    %c0_i32 = arith.constant 0 : i32
    %c0_i32_0 = arith.constant 0 : i32
    %c0_i32_1 = arith.constant 0 : i32
    return %c0_i32, %c0_i32_0 : i32, i32
  }
  func.func @transform_3(%arg0: i32, %arg1: i32, %arg2: i32) -> (i32, i32) {
    %c0_i32 = arith.constant 0 : i32
    %c0_i32_0 = arith.constant 0 : i32
    %c0_i32_1 = arith.constant 0 : i32
    return %c0_i32, %c0_i32_0 : i32, i32
  }
  func.func @transform_4(%arg0: i32, %arg1: i32, %arg2: i32) -> (i32, i32, i32) {
    %c0_i32 = arith.constant 0 : i32
    %c0_i32_0 = arith.constant 0 : i32
    return %arg0, %c0_i32, %arg1 : i32, i32, i32
  }
}

</mosaic_0001>

<llo_original>
// kernel: tpu_custom_call.1
$region0: #{tpu_custom_call.1}
  #allocation0 [shape = 'u32[]', space=smem, size = 0x4, offset = 0x4, fixed_abs, tag = 'smem constant byte address 0x4 - core index']
  #allocation1 [shape = 'u32[144,128]{1,0:T(1,128)}', space=vmem, size = 0x12000, scoped, tag = 'internal scratch']
  #allocation2 [shape = 'f32[1,256]{1,0:T(1,128)}', space=vmem, size = 0x400, scoped, tag = 'scratch operand']
  #allocation3 [shape = 'f32[1,256]{1,0:T(1,128)}', space=vmem, size = 0x400, scoped, tag = 'scratch operand']
  #allocation4 [shape = 'f32[8,256]{1,0:T(8,128)}', space=vmem, size = 0x2000, scoped, tag = 'scratch operand']
  %s0 = inlined_call_operand.hbm [shape: f32[2,8,256], index: 0, kind: input, shape index: {}]
  %s1 = inlined_call_operand.hbm [shape: f32[2,8,256], index: 1, kind: input, shape index: {}]
  %s2 = inlined_call_operand.vmem [shape: f32[8,8], index: 2, kind: input, shape index: {}]
  %s3 = inlined_call_operand.vmem [shape: f32[8,1], index: 3, kind: input, shape index: {}]
  %s4 = inlined_call_operand.hbm [shape: f32[2,8,256], index: 4, kind: output, shape index: {}]
  %s5 = sld [smem:[#allocation0]]
  $region65: #{tpu_custom_call.1} parent=0
    _
  %s7 = ssub.s32 1, %s5
  %s8 = scalar_select 0, %s7, %s5
  $region1: #{tpu_custom_call.1} parent=0
    #allocation5 [shape = 'u8[16384]{0}', space=vmem, size = 0x4000, scoped, tag = 'input window, operand 0']
    #allocation6 [shape = 's32[2]{0}', space=sflag, size = 0x8, scoped, tag = 'scoped memory for tpu_custom_call.1']
    #allocation7 [shape = 's32[2]{0}', space=sflag, size = 0x8, scoped, tag = 'scoped memory for tpu_custom_call.1']
    #allocation8 [shape = 'u8[16384]{0}', space=vmem, size = 0x4000, scoped, tag = 'input window, operand 1']
    #allocation9 [shape = 's32[2]{0}', space=sflag, size = 0x8, scoped, tag = 'scoped memory for tpu_custom_call.1']
    #allocation10 [shape = 'u8[16384]{0}', space=vmem, size = 0x4000, scoped, tag = 'output window, operand 0']
    %9 = vsyncpa [#allocation6], 0
    %s10 = scalar_lea.sflag [#allocation6], 1
    %11 = vsyncpa %s10, 0
    %12 = vsyncpa [#allocation9], 0
    %s13 = scalar_lea.sflag [#allocation9], 1
    %14 = vsyncpa %s13, 0
    %15 = vsyncpa [#allocation7], 0
    %s16 = scalar_lea.sflag [#allocation7], 1
    %17 = vsyncpa %s16, 0
    loop: start=0, step=1, limit=4
    $region2: #{tpu_custom_call.1} parent=1 // loop_pre_header
      _
    $region3: #{tpu_custom_call.1} parent=1 // loop_header
      %s19 = sphi 0, %s23
      %p20 = scmp.ge.s32.totalorder %s19, 4
      %s26 = sphi 0, %s45
      %s27 = sphi 0, %s41
      %s28 = sphi 0, %s37
      %s29 = sphi 0, %s26
      %s30 = sphi 0, %s27
      %s31 = sphi 0, %s28
      %s32 = sphi 0, %s29
      %s33 = sphi 0, %s30
      %s34 = sphi 0, %s31
      %s50 = sphi 0, %s52
      %s53 = sphi 0, %s50
      %s54 = sphi 0, %s53
      %s70 = sphi 0, %s54
      %s78 = sphi 0, %s80
      %s81 = sphi 0, %s78
      %s82 = sphi 0, %s81
      %s98 = sphi 0, %s82
      %s102 = sphi 0, %s102
      %s104 = sphi 0, %s102
      %s105 = sphi 0, %s104
      %s119 = sphi 0, %s105
      %s123 = sphi 0, %s123
      %s125 = sphi 0, %s123
      %s126 = sphi 0, %s125
      %s140 = sphi 0, %s126
      %s148 = sphi 0, %s150
      %s151 = sphi 0, %s148
      %s152 = sphi 0, %s151
      %s168 = sphi 0, %s152
    $region4: #{tpu_custom_call.1} parent=1 // loop_header_branch
      %22 = sbr.rel (%p20) target = $region8
    $region5: #{tpu_custom_call.1} parent=1 // loop_body
      %s24 = ssub.s32 %s19, 1
      %s25 = ssub.s32 %s19, 2
      %s35 = sadd.s32 1, %s28
      %p36 = scmp.ge.s32.totalorder %s35, 1
      %s37 = scalar_select %p36, 0, %s35
      %s38 = sadd.s32 1, %s27
      %s39 = scalar_select %p36, %s38, %s27
      %p40 = scmp.ge.s32.totalorder %s39, 1
      %s41 = scalar_select %p40, 0, %s39
      %s42 = sadd.s32 1, %s26
      %s43 = scalar_select %p40, %s42, %s26
      %p44 = scmp.ge.s32.totalorder %s43, 2
      %s45 = scalar_select %p44, 0, %s43
      %s46 = ssub.s32 %s26, %s45
      %s47 = ssub.s32 %s27, %s41
      %s48 = sor.u32 %s46, %s47
      %p49 = scmp.eq.s32.totalorder %s48, 0
      %s51 = sadd.s32 %s50, 1
      %s52 = scalar_select %p49, %s50, %s51
      %p55 = pneg %p49
      %p56 = scmp.eq.s32.totalorder %s19, 1
      %p57 = por %p55, %p56
      %p58 = scmp.ne.s32.totalorder %s50, %s53
      %p59 = scmp.eq.s32.totalorder %s19, 0
      %p60 = por %p58, %p59
      %p61 = scmp.ne.s32.totalorder %s50, %s53
      %p62 = scmp.eq.s32.totalorder %s24, 1
      %p63 = por %p61, %p62
      %p64 = scmp.ne.s32.totalorder %s53, %s54
      %p65 = scmp.eq.s32.totalorder %s24, 0
      %p66 = por %p64, %p65
      %p67 = scmp.ne.s32.totalorder %s53, %s54
      %p68 = scmp.eq.s32.totalorder %s25, 1
      %p69 = por %p67, %p68
      %p71 = scmp.ne.s32.totalorder %s54, %s70
      %p72 = scmp.eq.s32.totalorder %s25, 0
      %p73 = por %p71, %p72
      %s74 = ssub.s32 %s26, %s45
      %s75 = ssub.s32 %s28, %s37
      %s76 = sor.u32 %s74, %s75
      %p77 = scmp.eq.s32.totalorder %s76, 0
      %s79 = sadd.s32 %s78, 1
      %s80 = scalar_select %p77, %s78, %s79
      %p83 = pneg %p77
      %p84 = scmp.eq.s32.totalorder %s19, 1
      %p85 = por %p83, %p84
      %p86 = scmp.ne.s32.totalorder %s78, %s81
      %p87 = scmp.eq.s32.totalorder %s19, 0
      %p88 = por %p86, %p87
      %p89 = scmp.ne.s32.totalorder %s78, %s81
      %p90 = scmp.eq.s32.totalorder %s24, 1
      %p91 = por %p89, %p90
      %p92 = scmp.ne.s32.totalorder %s81, %s82
      %p93 = scmp.eq.s32.totalorder %s24, 0
      %p94 = por %p92, %p93
      %p95 = scmp.ne.s32.totalorder %s81, %s82
      %p96 = scmp.eq.s32.totalorder %s25, 1
      %p97 = por %p95, %p96
      %p99 = scmp.ne.s32.totalorder %s82, %s98
      %p100 = scmp.eq.s32.totalorder %s25, 0
      %p101 = por %p99, %p100
      %s103 = sadd.s32 %s102, 1
      %p106 = scmp.eq.s32.totalorder %s19, 1
      %p107 = scmp.ne.s32.totalorder %s102, %s104
      %p108 = scmp.eq.s32.totalorder %s19, 0
      %p109 = por %p107, %p108
      %p110 = scmp.ne.s32.totalorder %s102, %s104
      %p111 = scmp.eq.s32.totalorder %s24, 1
      %p112 = por %p110, %p111
      %p113 = scmp.ne.s32.totalorder %s104, %s105
      %p114 = scmp.eq.s32.totalorder %s24, 0
      %p115 = por %p113, %p114
      %p116 = scmp.ne.s32.totalorder %s104, %s105
      %p117 = scmp.eq.s32.totalorder %s25, 1
      %p118 = por %p116, %p117
      %p120 = scmp.ne.s32.totalorder %s105, %s119
      %p121 = scmp.eq.s32.totalorder %s25, 0
      %p122 = por %p120, %p121
      %s124 = sadd.s32 %s123, 1
      %p127 = scmp.eq.s32.totalorder %s19, 1
      %p128 = scmp.ne.s32.totalorder %s123, %s125
      %p129 = scmp.eq.s32.totalorder %s19, 0
      %p130 = por %p128, %p129
      %p131 = scmp.ne.s32.totalorder %s123, %s125
      %p132 = scmp.eq.s32.totalorder %s24, 1
      %p133 = por %p131, %p132
      %p134 = scmp.ne.s32.totalorder %s125, %s126
      %p135 = scmp.eq.s32.totalorder %s24, 0
      %p136 = por %p134, %p135
      %p137 = scmp.ne.s32.totalorder %s125, %s126
      %p138 = scmp.eq.s32.totalorder %s25, 1
      %p139 = por %p137, %p138
      %p141 = scmp.ne.s32.totalorder %s126, %s140
      %p142 = scmp.eq.s32.totalorder %s25, 0
      %p143 = por %p141, %p142
      %s144 = ssub.s32 %s26, %s45
      %s145 = ssub.s32 %s27, %s41
      %s146 = sor.u32 %s144, %s145
      %p147 = scmp.eq.s32.totalorder %s146, 0
      %s149 = sadd.s32 %s148, 1
      %s150 = scalar_select %p147, %s148, %s149
      %p153 = pneg %p147
      %p154 = scmp.eq.s32.totalorder %s19, 1
      %p155 = por %p153, %p154
      %p156 = scmp.ne.s32.totalorder %s148, %s151
      %p157 = scmp.eq.s32.totalorder %s19, 0
      %p158 = por %p156, %p157
      %p159 = scmp.ne.s32.totalorder %s148, %s151
      %p160 = scmp.eq.s32.totalorder %s24, 1
      %p161 = por %p159, %p160
      %p162 = scmp.ne.s32.totalorder %s151, %s152
      %p163 = scmp.eq.s32.totalorder %s24, 0
      %p164 = por %p162, %p163
      %p165 = scmp.ne.s32.totalorder %s151, %s152
      %p166 = scmp.eq.s32.totalorder %s25, 1
      %p167 = por %p165, %p166
      %p169 = scmp.ne.s32.totalorder %s152, %s168
      %p170 = scmp.eq.s32.totalorder %s25, 0
      %p171 = por %p169, %p170
      %p172 = scmp.le.s32.totalorder 1, %s19
      %p173 = scmp.lt.s32.totalorder %s19, 3
      %p174 = pnand %p172, %p173
      %p175 = pneg %p174
      // Predicated region
      $region9: #{tpu_custom_call.1} parent=5 // pred_check
        _
      $region10: #{tpu_custom_call.1} parent=5 // pred_check_branch
        %177 = sbr.rel (%p174) target = $region12
      $region11: #{tpu_custom_call.1} parent=5 // pred_region
        %s178 = ssub.s32 %s19, 1
        // Predicated region
        $region13: #{tpu_custom_call.1} parent=11 // pred_check
          %p179 = pneg %p115
        $region14: #{tpu_custom_call.1} parent=11 // pred_check_branch
          %181 = sbr.rel (%p179) target = $region16
        $region15: #{tpu_custom_call.1} parent=11 // pred_region
          _
        $region16: #{tpu_custom_call.1} parent=11 // pred_fallthru
          _
        // Predicated region
        $region17: #{tpu_custom_call.1} parent=11 // pred_check
          %p182 = pneg %p136
        $region18: #{tpu_custom_call.1} parent=11 // pred_check_branch
          %184 = sbr.rel (%p182) target = $region20
        $region19: #{tpu_custom_call.1} parent=11 // pred_region
          _
        $region20: #{tpu_custom_call.1} parent=11 // pred_fallthru
          _
      $region12: #{tpu_custom_call.1} parent=5 // pred_fallthru
        _
      %p185 = scmp.lt.s32.totalorder %s19, 2
      // Predicated region
      $region21: #{tpu_custom_call.1} parent=5 // pred_check
        %p186 = pneg %p185
      $region22: #{tpu_custom_call.1} parent=5 // pred_check_branch
        %188 = sbr.rel (%p186) target = $region24
      $region23: #{tpu_custom_call.1} parent=5 // pred_region
        // Predicated region
        $region25: #{tpu_custom_call.1} parent=23 // pred_check
          %p189 = pneg %p60
        $region26: #{tpu_custom_call.1} parent=23 // pred_check_branch
          %191 = sbr.rel (%p189) target = $region28
        $region27: #{tpu_custom_call.1} parent=23 // pred_region
          %s192 = sand.u32 %s50, 1
          %s193 = scalar_lea.sflag [#allocation6], %s192
          %s194 = sand.u32 %s50, 1
          %s195 = smul.addr %s194, 16
          %s196 = scalar_lea.vmem [#allocation5], %s195
          %s197 = smul.u32 2, %s27
          %s199 = ssub.s32 256, 256
          %200 = vsyncadd %s193, %s199
          %s201 = smul.addr %s26, 2
          %s202 = sadd.s32 %s197, %s201
          %s203 = smul.addr %s202, 128
          %s204 = scalar_lea.hbm %s0, %s203
          %s206 = sshll.u32 %s196, 4
          %s207 = int_to_ptr.vmem [resolvable:$true] %s206
          %209 = dma.hbm_to_vmem [thread:$0]  %s204, 256, %s207, %s193
        $region28: #{tpu_custom_call.1} parent=23 // pred_fallthru
          _
        // Predicated region
        $region29: #{tpu_custom_call.1} parent=23 // pred_check
          %p210 = pneg %p88
        $region30: #{tpu_custom_call.1} parent=23 // pred_check_branch
          %212 = sbr.rel (%p210) target = $region32
        $region31: #{tpu_custom_call.1} parent=23 // pred_region
          %s213 = sand.u32 %s78, 1
          %s214 = scalar_lea.sflag [#allocation9], %s213
          %s215 = sand.u32 %s78, 1
          %s216 = smul.addr %s215, 16
          %s217 = scalar_lea.vmem [#allocation8], %s216
          %s218 = smul.u32 2, %s28
          %s220 = ssub.s32 256, 256
          %221 = vsyncadd %s214, %s220
          %s222 = smul.addr %s26, 2
          %s223 = sadd.s32 %s218, %s222
          %s224 = smul.addr %s223, 128
          %s225 = scalar_lea.hbm %s1, %s224
          %s227 = sshll.u32 %s217, 4
          %s228 = int_to_ptr.vmem [resolvable:$true] %s227
          %230 = dma.hbm_to_vmem [thread:$0]  %s225, 256, %s228, %s214
        $region32: #{tpu_custom_call.1} parent=23 // pred_fallthru
          _
      $region24: #{tpu_custom_call.1} parent=5 // pred_fallthru
        _
      %p231 = scmp.le.s32.totalorder 1, %s19
      %p232 = scmp.lt.s32.totalorder %s19, 3
      %p233 = pnand %p231, %p232
      %p234 = pneg %p233
      // Predicated region
      $region33: #{tpu_custom_call.1} parent=5 // pred_check
        _
      $region34: #{tpu_custom_call.1} parent=5 // pred_check_branch
        %236 = sbr.rel (%p233) target = $region36
      $region35: #{tpu_custom_call.1} parent=5 // pred_region
        %s237 = ssub.s32 %s19, 1
        %s238 = sand.u32 %s53, 1
        %s239 = scalar_lea.sflag [#allocation6], %s238
        %s240 = sand.u32 %s53, 1
        %s241 = smul.addr %s240, 16
        %s242 = scalar_lea.vmem [#allocation5], %s241
        // Predicated region
        $region37: #{tpu_custom_call.1} parent=35 // pred_check
          %p243 = pneg %p66
        $region38: #{tpu_custom_call.1} parent=35 // pred_check_branch
          %245 = sbr.rel (%p243) target = $region40
        $region39: #{tpu_custom_call.1} parent=35 // pred_region
          %246 = dma.done %s239, 256
        $region40: #{tpu_custom_call.1} parent=35 // pred_fallthru
          _
        %s247 = sand.u32 %s81, 1
        %s248 = scalar_lea.sflag [#allocation9], %s247
        %s249 = sand.u32 %s81, 1
        %s250 = smul.addr %s249, 16
        %s251 = scalar_lea.vmem [#allocation8], %s250
        // Predicated region
        $region41: #{tpu_custom_call.1} parent=35 // pred_check
          %p252 = pneg %p94
        $region42: #{tpu_custom_call.1} parent=35 // pred_check_branch
          %254 = sbr.rel (%p252) target = $region44
        $region43: #{tpu_custom_call.1} parent=35 // pred_region
          %255 = dma.done %s248, 256
        $region44: #{tpu_custom_call.1} parent=35 // pred_fallthru
          _
        %s256 = sand.u32 %s53, 1
        %s257 = scalar_lea.sflag [#allocation6], %s256
        %s258 = sand.u32 %s53, 1
        %s259 = smul.addr %s258, 16
        %s260 = scalar_lea.vmem [#allocation5], %s259
        %p261 = pneg %p66
        %p262 = pneg %p63
        %s263 = sand.u32 %s81, 1
        %s264 = scalar_lea.sflag [#allocation9], %s263
        %s265 = sand.u32 %s81, 1
        %s266 = smul.addr %s265, 16
        %s267 = scalar_lea.vmem [#allocation8], %s266
        %p268 = pneg %p94
        %p269 = pneg %p91
        %p270 = pneg %p115
        %p271 = pneg %p112
        %p272 = pneg %p136
        %p273 = pneg %p133
        %p274 = pneg %p164
        %p275 = pneg %p161
        %s276 = sand.u32 %s151, 1
        %s277 = scalar_lea.sflag [#allocation7], %s276
        %s278 = sand.u32 %s151, 1
        %s279 = smul.addr %s278, 16
        %s280 = scalar_lea.vmem [#allocation10], %s279
        %s281 = smul.u32 2, %s30
        %s282 = smul.u32 2, %s31
        %s283 = smul.u32 2, %s30
        %p284 = scmp.eq.s32.totalorder %s31, 0
        // Predicated region
        $region45: #{tpu_custom_call.1} parent=35 // pred_check
          %p285 = pneg %p284
        $region46: #{tpu_custom_call.1} parent=35 // pred_check_branch
          %287 = sbr.rel (%p285) target = $region48
        $region47: #{tpu_custom_call.1} parent=35 // pred_region
          %v288 = vlaneseq
          %vm289 = vcmp.ge.s32.totalorder %v288, 0
          %vm290 = vcmp.lt.s32.totalorder %v288, 256
          %vm291 = vmand %vm289, %vm290
          %292 = vst.msk [vmem:[#allocation2] sm:$0x3] %vm291, -1e+30
          %293 = vst.msk [vmem:[#allocation3] sm:$0x3] %vm291, 0.0
          %294 = vst [vmem:[#allocation4] sm:$0xff] 0.0
          %295 = vst [vmem:[#allocation4 + $0x8] sm:$0xff] 0.0
        $region48: #{tpu_custom_call.1} parent=35 // pred_fallthru
          _
        %v296 = vld [vmem:[%s242] sm:$0xff]
        %v297 = vld [vmem:[%s242 + $0x8] sm:$0xff]
        %v298 = vld [vmem:[%s251] sm:$0xff]
        %v299 = vld [vmem:[%s251 + $0x8] sm:$0xff]
        %300 = vxpose.xlu0.b32.start [1/16] %v298, 128
        %301 = vxpose.xlu0.b32.cont [2/16] 0.0, 128
        %302 = vxpose.xlu0.b32.cont [3/16] 0.0, 128
        %303 = vxpose.xlu0.b32.cont [4/16] 0.0, 128
        %304 = vxpose.xlu0.b32.cont [5/16] 0.0, 128
        %305 = vxpose.xlu0.b32.cont [6/16] 0.0, 128
        %306 = vxpose.xlu0.b32.cont [7/16] 0.0, 128
        %307 = vxpose.xlu0.b32.cont [8/16] 0.0, 128
        %308 = vxpose.xlu0.b32.cont [9/16] 0.0, 128
        %309 = vxpose.xlu0.b32.cont [10/16] 0.0, 128
        %310 = vxpose.xlu0.b32.cont [11/16] 0.0, 128
        %311 = vxpose.xlu0.b32.cont [12/16] 0.0, 128
        %312 = vxpose.xlu0.b32.cont [13/16] 0.0, 128
        %313 = vxpose.xlu0.b32.cont [14/16] 0.0, 128
        %314 = vxpose.xlu0.b32.cont [15/16] 0.0, 128
        %315 = vxpose.xlu0.b32.end [16/16] 0.0, 128
        %v316 = vpop.trf.xlu0
        %v317 = vpop.trf.xlu0
        %v318 = vpop.trf.xlu0
        %v319 = vpop.trf.xlu0
        %v320 = vpop.trf.xlu0
        %v321 = vpop.trf.xlu0
        %v322 = vpop.trf.xlu0
        %v323 = vpop.trf.xlu0
        %v324 = vpop.trf.xlu0
        %v325 = vpop.trf.xlu0
        %v326 = vpop.trf.xlu0
        %v327 = vpop.trf.xlu0
        %v328 = vpop.trf.xlu0
        %v329 = vpop.trf.xlu0
        %v330 = vpop.trf.xlu0
        %v331 = vpop.trf.xlu0
        %332 = vxpose.xlu0.b32.start [1/16] %v299, 128
        %333 = vxpose.xlu0.b32.cont [2/16] 0.0, 128
        %334 = vxpose.xlu0.b32.cont [3/16] 0.0, 128
        %335 = vxpose.xlu0.b32.cont [4/16] 0.0, 128
        %336 = vxpose.xlu0.b32.cont [5/16] 0.0, 128
        %337 = vxpose.xlu0.b32.cont [6/16] 0.0, 128
        %338 = vxpose.xlu0.b32.cont [7/16] 0.0, 128
        %339 = vxpose.xlu0.b32.cont [8/16] 0.0, 128
        %340 = vxpose.xlu0.b32.cont [9/16] 0.0, 128
        %341 = vxpose.xlu0.b32.cont [10/16] 0.0, 128
        %342 = vxpose.xlu0.b32.cont [11/16] 0.0, 128
        %343 = vxpose.xlu0.b32.cont [12/16] 0.0, 128
        %344 = vxpose.xlu0.b32.cont [13/16] 0.0, 128
        %345 = vxpose.xlu0.b32.cont [14/16] 0.0, 128
        %346 = vxpose.xlu0.b32.cont [15/16] 0.0, 128
        %347 = vxpose.xlu0.b32.end [16/16] 0.0, 128
        %v348 = vpop.trf.xlu0
        %v349 = vpop.trf.xlu0
        %v350 = vpop.trf.xlu0
        %v351 = vpop.trf.xlu0
        %v352 = vpop.trf.xlu0
        %v353 = vpop.trf.xlu0
        %v354 = vpop.trf.xlu0
        %v355 = vpop.trf.xlu0
        %v356 = vpop.trf.xlu0
        %v357 = vpop.trf.xlu0
        %v358 = vpop.trf.xlu0
        %v359 = vpop.trf.xlu0
        %v360 = vpop.trf.xlu0
        %v361 = vpop.trf.xlu0
        %v362 = vpop.trf.xlu0
        %v363 = vpop.trf.xlu0
        %vm364 = vcmask 64512
        %v366 = vsel %vm364, %v316, 0
        %v369 = vsel %vm364, %v317, 0
        %v372 = vsel %vm364, %v318, 0
        %v375 = vsel %vm364, %v319, 0
        %v378 = vsel %vm364, %v320, 0
        %v381 = vsel %vm364, %v321, 0
        %v384 = vsel %vm364, %v322, 0
        %v387 = vsel %vm364, %v323, 0
        %v390 = vsel %vm364, %v324, 0
        %v393 = vsel %vm364, %v325, 0
        %v396 = vsel %vm364, %v326, 0
        %v399 = vsel %vm364, %v327, 0
        %v402 = vsel %vm364, %v328, 0
        %v405 = vsel %vm364, %v329, 0
        %v408 = vsel %vm364, %v330, 0
        %v411 = vsel %vm364, %v331, 0
        %v414 = vsel %vm364, %v348, 0
        %v417 = vsel %vm364, %v349, 0
        %v420 = vsel %vm364, %v350, 0
        %v423 = vsel %vm364, %v351, 0
        %v426 = vsel %vm364, %v352, 0
        %v429 = vsel %vm364, %v353, 0
        %v432 = vsel %vm364, %v354, 0
        %v435 = vsel %vm364, %v355, 0
        %v438 = vsel %vm364, %v356, 0
        %v441 = vsel %vm364, %v357, 0
        %v444 = vsel %vm364, %v358, 0
        %v447 = vsel %vm364, %v359, 0
        %v450 = vsel %vm364, %v360, 0
        %v453 = vsel %vm364, %v361, 0
        %v456 = vsel %vm364, %v362, 0
        %v459 = vsel %vm364, %v363, 0
        %461 = vmatprep.subr.mxu0 %v297
        %462 = vmatpush1.msra.mxu0 %v296
        %463 = vmatprep.subr.mxu0 0.0
        %464 = vmatpush1.msra.mxu0 0.0
        %465 = vmatprep.subr.mxu0 0.0
        %466 = vmatpush1.msra.mxu0 0.0
        %467 = vmatprep.subr.mxu0 0.0
        %468 = vmatpush1.msra.mxu0 0.0
        %469 = vmatprep.subr.mxu0 0.0
        %470 = vmatpush1.msra.mxu0 0.0
        %471 = vmatprep.subr.mxu0 0.0
        %472 = vmatpush1.msra.mxu0 0.0
        %473 = vmatprep.subr.mxu0 0.0
        %474 = vmatpush1.msra.mxu0 0.0
        %475 = vmatprep.subr.mxu0 0.0
        %476 = vmatpush1.msra.mxu0 0.0
        %477 = vmatprep.subr.mxu0 0.0
        %478 = vmatpush1.msra.mxu0 0.0
        %479 = vmatprep.subr.mxu0 0.0
        %480 = vmatpush1.msra.mxu0 0.0
        %481 = vmatprep.subr.mxu0 0.0
        %482 = vmatpush1.msra.mxu0 0.0
        %483 = vmatprep.subr.mxu0 0.0
        %484 = vmatpush1.msra.mxu0 0.0
        %485 = vmatprep.subr.mxu0 0.0
        %486 = vmatpush1.msra.mxu0 0.0
        %487 = vmatprep.subr.mxu0 0.0
        %488 = vmatpush1.msra.mxu0 0.0
        %489 = vmatprep.subr.mxu0 0.0
        %490 = vmatpush1.msra.mxu0 0.0
        %491 = vmatprep.subr.mxu0 0.0
        %492 = vmatpush1.msra.mxu0 0.0
        %493 = vmatprep.subr.mxu0 0.0
        %494 = vmatpush1.msra.mxu0 0.0
        %495 = vmatprep.subr.mxu0 0.0
        %496 = vmatpush1.msra.mxu0 0.0
        %497 = vmatprep.subr.mxu0 0.0
        %498 = vmatpush1.msra.mxu0 0.0
        %499 = vmatprep.subr.mxu0 0.0
        %500 = vmatpush1.msra.mxu0 0.0
        %501 = vmatprep.subr.mxu0 0.0
        %502 = vmatpush1.msra.mxu0 0.0
        %503 = vmatprep.subr.mxu0 0.0
        %504 = vmatpush1.msra.mxu0 0.0
        %505 = vmatprep.subr.mxu0 0.0
        %506 = vmatpush1.msra.mxu0 0.0
        %507 = vmatprep.subr.mxu0 0.0
        %508 = vmatpush1.msra.mxu0 0.0
        %509 = vmatprep.subr.mxu0 0.0
        %510 = vmatpush1.msra.mxu0 0.0
        %511 = vmatprep.subr.mxu0 0.0
        %512 = vmatpush1.msra.mxu0 0.0
        %513 = vmatprep.subr.mxu0 0.0
        %514 = vmatpush1.msra.mxu0 0.0
        %515 = vmatprep.subr.mxu0 0.0
        %516 = vmatpush1.msra.mxu0 0.0
        %517 = vmatprep.subr.mxu0 0.0
        %518 = vmatpush1.msra.mxu0 0.0
        %519 = vmatprep.subr.mxu0 0.0
        %520 = vmatpush1.msra.mxu0 0.0
        %521 = vmatprep.subr.mxu0 0.0
        %522 = vmatpush1.msra.mxu0 0.0
        %523 = vmatprep.subr.mxu0 0.0
        %524 = vmatpush1.msra.mxu0 0.0
        %525 = vmatprep.mubr.f32.mxu0 0.0
        %526 = vmatmul.mubr.f32.gmra.mrb[0].mxu0 %v366
        %v527 = vpop.f32.mrb[0].mxu0
        %v528 = vadd.f32 0.0, %v527
        %v529 = vpop.f32.mrb[0].mxu0
        %v530 = vadd.f32 0.0, %v529
        %531 = vmatprep.mubr.f32.mxu0 0.0
        %532 = vmatmul.mubr.f32.gmra.mrb[0].mxu0 %v369
        %v533 = vpop.f32.mrb[0].mxu0
        %v534 = vadd.f32 0.0, %v533
        %v535 = vpop.f32.mrb[0].mxu0
        %v536 = vadd.f32 0.0, %v535
        %537 = vmatprep.mubr.f32.mxu0 0.0
        %538 = vmatmul.mubr.f32.gmra.mrb[0].mxu0 %v372
        %v539 = vpop.f32.mrb[0].mxu0
        %v540 = vadd.f32 0.0, %v539
        %v541 = vpop.f32.mrb[0].mxu0
        %v542 = vadd.f32 0.0, %v541
        %543 = vmatprep.mubr.f32.mxu0 0.0
        %544 = vmatmul.mubr.f32.gmra.mrb[0].mxu0 %v375
        %v545 = vpop.f32.mrb[0].mxu0
        %v546 = vadd.f32 0.0, %v545
        %v547 = vpop.f32.mrb[0].mxu0
        %v548 = vadd.f32 0.0, %v547
        %549 = vmatprep.mubr.f32.mxu0 0.0
        %550 = vmatmul.mubr.f32.gmra.mrb[0].mxu0 %v378
        %v551 = vpop.f32.mrb[0].mxu0
        %v552 = vadd.f32 0.0, %v551
        %v553 = vpop.f32.mrb[0].mxu0
        %v554 = vadd.f32 0.0, %v553
        %555 = vmatprep.mubr.f32.mxu0 0.0
        %556 = vmatmul.mubr.f32.gmra.mrb[0].mxu0 %v381
        %v557 = vpop.f32.mrb[0].mxu0
        %v558 = vadd.f32 0.0, %v557
        %v559 = vpop.f32.mrb[0].mxu0
        %v560 = vadd.f32 0.0, %v559
        %561 = vmatprep.mubr.f32.mxu0 0.0
        %562 = vmatmul.mubr.f32.gmra.mrb[0].mxu0 %v384
        %v563 = vpop.f32.mrb[0].mxu0
        %v564 = vadd.f32 0.0, %v563
        %v565 = vpop.f32.mrb[0].mxu0
        %v566 = vadd.f32 0.0, %v565
        %567 = vmatprep.mubr.f32.mxu0 0.0
        %568 = vmatmul.mubr.f32.gmra.mrb[0].mxu0 %v387
        %v569 = vpop.f32.mrb[0].mxu0
        %v570 = vadd.f32 0.0, %v569
        %v571 = vpop.f32.mrb[0].mxu0
        %v572 = vadd.f32 0.0, %v571
        %573 = vmatprep.mubr.f32.mxu0 0.0
        %574 = vmatmul.mubr.f32.gmra.mrb[0].mxu0 %v390
        %v575 = vpop.f32.mrb[0].mxu0
        %v576 = vadd.f32 0.0, %v575
        %v577 = vpop.f32.mrb[0].mxu0
        %v578 = vadd.f32 0.0, %v577
        %579 = vmatprep.mubr.f32.mxu0 0.0
        %580 = vmatmul.mubr.f32.gmra.mrb[0].mxu0 %v393
        %v581 = vpop.f32.mrb[0].mxu0
        %v582 = vadd.f32 0.0, %v581
        %v583 = vpop.f32.mrb[0].mxu0
        %v584 = vadd.f32 0.0, %v583
        %585 = vmatprep.mubr.f32.mxu0 0.0
        %586 = vmatmul.mubr.f32.gmra.mrb[0].mxu0 %v396
        %v587 = vpop.f32.mrb[0].mxu0
        %v588 = vadd.f32 0.0, %v587
        %v589 = vpop.f32.mrb[0].mxu0
        %v590 = vadd.f32 0.0, %v589
        %591 = vmatprep.mubr.f32.mxu0 0.0
        %592 = vmatmul.mubr.f32.gmra.mrb[0].mxu0 %v399
        %v593 = vpop.f32.mrb[0].mxu0
        %v594 = vadd.f32 0.0, %v593
        %v595 = vpop.f32.mrb[0].mxu0
        %v596 = vadd.f32 0.0, %v595
        %597 = vmatprep.mubr.f32.mxu0 0.0
        %598 = vmatmul.mubr.f32.gmra.mrb[0].mxu0 %v402
        %v599 = vpop.f32.mrb[0].mxu0
        %v600 = vadd.f32 0.0, %v599
        %v601 = vpop.f32.mrb[0].mxu0
        %v602 = vadd.f32 0.0, %v601
        %603 = vmatprep.mubr.f32.mxu0 0.0
        %604 = vmatmul.mubr.f32.gmra.mrb[0].mxu0 %v405
        %v605 = vpop.f32.mrb[0].mxu0
        %v606 = vadd.f32 0.0, %v605
        %v607 = vpop.f32.mrb[0].mxu0
        %v608 = vadd.f32 0.0, %v607
        %609 = vmatprep.mubr.f32.mxu0 0.0
        %610 = vmatmul.mubr.f32.gmra.mrb[0].mxu0 %v408
        %v611 = vpop.f32.mrb[0].mxu0
        %v612 = vadd.f32 0.0, %v611
        %v613 = vpop.f32.mrb[0].mxu0
        %v614 = vadd.f32 0.0, %v613
        %615 = vmatprep.mubr.f32.mxu0 0.0
        %616 = vmatmul.mubr.f32.gmra.mrb[0].mxu0 %v411
        %v617 = vpop.f32.mrb[0].mxu0
        %v618 = vadd.f32 0.0, %v617
        %v619 = vpop.f32.mrb[0].mxu0
        %v620 = vadd.f32 0.0, %v619
        %621 = vmatprep.mubr.f32.mxu0 0.0
        %622 = vmatmul.mubr.f32.gmra.mrb[0].mxu0 %v414
        %v623 = vpop.f32.mrb[0].mxu0
        %v624 = vadd.f32 0.0, %v623
        %v625 = vpop.f32.mrb[0].mxu0
        %v626 = vadd.f32 0.0, %v625
        %627 = vmatprep.mubr.f32.mxu0 0.0
        %628 = vmatmul.mubr.f32.gmra.mrb[0].mxu0 %v417
        %v629 = vpop.f32.mrb[0].mxu0
        %v630 = vadd.f32 0.0, %v629
        %v631 = vpop.f32.mrb[0].mxu0
        %v632 = vadd.f32 0.0, %v631
        %633 = vmatprep.mubr.f32.mxu0 0.0
        %634 = vmatmul.mubr.f32.gmra.mrb[0].mxu0 %v420
        %v635 = vpop.f32.mrb[0].mxu0
        %v636 = vadd.f32 0.0, %v635
        %v637 = vpop.f32.mrb[0].mxu0
        %v638 = vadd.f32 0.0, %v637
        %639 = vmatprep.mubr.f32.mxu0 0.0
        %640 = vmatmul.mubr.f32.gmra.mrb[0].mxu0 %v423
        %v641 = vpop.f32.mrb[0].mxu0
        %v642 = vadd.f32 0.0, %v641
        %v643 = vpop.f32.mrb[0].mxu0
        %v644 = vadd.f32 0.0, %v643
        %645 = vmatprep.mubr.f32.mxu0 0.0
        %646 = vmatmul.mubr.f32.gmra.mrb[0].mxu0 %v426
        %v647 = vpop.f32.mrb[0].mxu0
        %v648 = vadd.f32 0.0, %v647
        %v649 = vpop.f32.mrb[0].mxu0
        %v650 = vadd.f32 0.0, %v649
        %651 = vmatprep.mubr.f32.mxu0 0.0
        %652 = vmatmul.mubr.f32.gmra.mrb[0].mxu0 %v429
        %v653 = vpop.f32.mrb[0].mxu0
        %v654 = vadd.f32 0.0, %v653
        %v655 = vpop.f32.mrb[0].mxu0
        %v656 = vadd.f32 0.0, %v655
        %657 = vmatprep.mubr.f32.mxu0 0.0
        %658 = vmatmul.mubr.f32.gmra.mrb[0].mxu0 %v432
        %v659 = vpop.f32.mrb[0].mxu0
        %v660 = vadd.f32 0.0, %v659
        %v661 = vpop.f32.mrb[0].mxu0
        %v662 = vadd.f32 0.0, %v661
        %663 = vmatprep.mubr.f32.mxu0 0.0
        %664 = vmatmul.mubr.f32.gmra.mrb[0].mxu0 %v435
        %v665 = vpop.f32.mrb[0].mxu0
        %v666 = vadd.f32 0.0, %v665
        %v667 = vpop.f32.mrb[0].mxu0
        %v668 = vadd.f32 0.0, %v667
        %669 = vmatprep.mubr.f32.mxu0 0.0
        %670 = vmatmul.mubr.f32.gmra.mrb[0].mxu0 %v438
        %v671 = vpop.f32.mrb[0].mxu0
        %v672 = vadd.f32 0.0, %v671
        %v673 = vpop.f32.mrb[0].mxu0
        %v674 = vadd.f32 0.0, %v673
        %675 = vmatprep.mubr.f32.mxu0 0.0
        %676 = vmatmul.mubr.f32.gmra.mrb[0].mxu0 %v441
        %v677 = vpop.f32.mrb[0].mxu0
        %v678 = vadd.f32 0.0, %v677
        %v679 = vpop.f32.mrb[0].mxu0
        %v680 = vadd.f32 0.0, %v679
        %681 = vmatprep.mubr.f32.mxu0 0.0
        %682 = vmatmul.mubr.f32.gmra.mrb[0].mxu0 %v444
        %v683 = vpop.f32.mrb[0].mxu0
        %v684 = vadd.f32 0.0, %v683
        %v685 = vpop.f32.mrb[0].mxu0
        %v686 = vadd.f32 0.0, %v685
        %687 = vmatprep.mubr.f32.mxu0 0.0
        %688 = vmatmul.mubr.f32.gmra.mrb[0].mxu0 %v447
        %v689 = vpop.f32.mrb[0].mxu0
        %v690 = vadd.f32 0.0, %v689
        %v691 = vpop.f32.mrb[0].mxu0
        %v692 = vadd.f32 0.0, %v691
        %693 = vmatprep.mubr.f32.mxu0 0.0
        %694 = vmatmul.mubr.f32.gmra.mrb[0].mxu0 %v450
        %v695 = vpop.f32.mrb[0].mxu0
        %v696 = vadd.f32 0.0, %v695
        %v697 = vpop.f32.mrb[0].mxu0
        %v698 = vadd.f32 0.0, %v697
        %699 = vmatprep.mubr.f32.mxu0 0.0
        %700 = vmatmul.mubr.f32.gmra.mrb[0].mxu0 %v453
        %v701 = vpop.f32.mrb[0].mxu0
        %v702 = vadd.f32 0.0, %v701
        %v703 = vpop.f32.mrb[0].mxu0
        %v704 = vadd.f32 0.0, %v703
        %705 = vmatprep.mubr.f32.mxu0 0.0
        %706 = vmatmul.mubr.f32.gmra.mrb[0].mxu0 %v456
        %v707 = vpop.f32.mrb[0].mxu0
        %v708 = vadd.f32 0.0, %v707
        %v709 = vpop.f32.mrb[0].mxu0
        %v710 = vadd.f32 0.0, %v709
        %711 = vmatprep.mubr.f32.mxu0 0.0
        %712 = vmatmul.mubr.f32.gmra.mrb[0].mxu0 %v459
        %v713 = vpop.f32.mrb[0].mxu0
        %v714 = vadd.f32 0.0, %v713
        %v715 = vpop.f32.mrb[0].mxu0
        %v716 = vadd.f32 0.0, %v715
        %717 = vdwg.mxu0
        %v718 = vld [vmem:[#allocation2] sm:$0x3]
        %v719 = vmax.f32 %v528, %v540
        %v720 = vmax.f32 %v534, %v546
        %v721 = vmax.f32 %v719, %v552
        %v722 = vmax.f32 %v720, %v558
        %v723 = vmax.f32 %v721, %v564
        %v724 = vmax.f32 %v722, %v570
        %v725 = vmax.f32 %v723, %v576
        %v726 = vmax.f32 %v724, %v582
        %v727 = vmax.f32 %v725, %v588
        %v728 = vmax.f32 %v726, %v594
        %v729 = vmax.f32 %v727, %v600
        %v730 = vmax.f32 %v728, %v606
        %v731 = vmax.f32 %v729, %v612
        %v732 = vmax.f32 %v730, %v618
        %v733 = vmax.f32 %v731, %v624
        %v734 = vmax.f32 %v732, %v630
        %v735 = vmax.f32 %v733, %v636
        %v736 = vmax.f32 %v734, %v642
        %v737 = vmax.f32 %v735, %v648
        %v738 = vmax.f32 %v736, %v654
        %v739 = vmax.f32 %v737, %v660
        %v740 = vmax.f32 %v738, %v666
        %v741 = vmax.f32 %v739, %v672
        %v742 = vmax.f32 %v740, %v678
        %v743 = vmax.f32 %v741, %v684
        %v744 = vmax.f32 %v742, %v690
        %v745 = vmax.f32 %v743, %v696
        %v746 = vmax.f32 %v744, %v702
        %v747 = vmax.f32 %v745, %v708
        %v748 = vmax.f32 %v746, %v714
        %v749 = vmax.f32 %v747, %v748
        %v750 = vrot.slane %v749, 4
        %v751 = vmax.f32 %v749, %v750
        %v752 = vrot.slane %v751, 2
        %v753 = vmax.f32 %v751, %v752
        %v754 = vrot.slane %v753, 1
        %v755 = vmax.f32 %v753, %v754
        %v756 = vmax.f32 %v530, %v542
        %v757 = vmax.f32 %v536, %v548
        %v758 = vmax.f32 %v756, %v554
        %v759 = vmax.f32 %v757, %v560
        %v760 = vmax.f32 %v758, %v566
        %v761 = vmax.f32 %v759, %v572
        %v762 = vmax.f32 %v760, %v578
        %v763 = vmax.f32 %v761, %v584
        %v764 = vmax.f32 %v762, %v590
        %v765 = vmax.f32 %v763, %v596
        %v766 = vmax.f32 %v764, %v602
        %v767 = vmax.f32 %v765, %v608
        %v768 = vmax.f32 %v766, %v614
        %v769 = vmax.f32 %v767, %v620
        %v770 = vmax.f32 %v768, %v626
        %v771 = vmax.f32 %v769, %v632
        %v772 = vmax.f32 %v770, %v638
        %v773 = vmax.f32 %v771, %v644
        %v774 = vmax.f32 %v772, %v650
        %v775 = vmax.f32 %v773, %v656
        %v776 = vmax.f32 %v774, %v662
        %v777 = vmax.f32 %v775, %v668
        %v778 = vmax.f32 %v776, %v674
        %v779 = vmax.f32 %v777, %v680
        %v780 = vmax.f32 %v778, %v686
        %v781 = vmax.f32 %v779, %v692
        %v782 = vmax.f32 %v780, %v698
        %v783 = vmax.f32 %v781, %v704
        %v784 = vmax.f32 %v782, %v710
        %v785 = vmax.f32 %v783, %v716
        %v786 = vmax.f32 %v784, %v785
        %v787 = vrot.slane %v786, 4
        %v788 = vmax.f32 %v786, %v787
        %v789 = vrot.slane %v788, 2
        %v790 = vmax.f32 %v788, %v789
        %v791 = vrot.slane %v790, 1
        %v792 = vmax.f32 %v790, %v791
        %v795 = vcombine.low %v755, %v792
        %v797 = vunpack.c.l.s4 1966171168
        %v798 = vunpack.c.0.s8 %v797
        %v799 = vlaneseq
        %v800 = vshrl.u32 %v799, 7
        %v801 = vsub.s32 %v798, %v800
        %v802 = vrot.slane %v795, %v801
        %v804 = vunpack.c.l.s4 1966171168
        %v805 = vunpack.c.0.s8 %v804
        %v806 = vlaneseq
        %v807 = vshrl.u32 %v806, 7
        %v808 = vsub.s32 %v805, %v807
        %v809 = vrot.slane %v802, %v808
        %v811 = vmax.f32 %v718, %v809
        %v812 = vsub.f32 %v718, %v811
        %v813 = vmul.f32 %v812, 1.442695
        %v814 = vpow.pop %v813
        %v816 = vlaneseq
        %v817 = vshrl.u32 %v816, 7
        %v818 = vsub.s32 0, %v817
        %v819 = vrot.slane %v811, %v818
        %v820 = vlaneseq
        %v821 = vshrl.u32 %v820, 7
        %v822 = vsub.s32 1, %v821
        %v823 = vrot.slane %v811, %v822
        %v826 = vsub.f32 %v528, %v819
        %v827 = vsub.f32 %v530, %v823
        %v828 = vsub.f32 %v534, %v819
        %v829 = vsub.f32 %v536, %v823
        %v830 = vsub.f32 %v540, %v819
        %v831 = vsub.f32 %v542, %v823
        %v832 = vsub.f32 %v546, %v819
        %v833 = vsub.f32 %v548, %v823
        %v834 = vsub.f32 %v552, %v819
        %v835 = vsub.f32 %v554, %v823
        %v836 = vsub.f32 %v558, %v819
        %v837 = vsub.f32 %v560, %v823
        %v838 = vsub.f32 %v564, %v819
        %v839 = vsub.f32 %v566, %v823
        %v840 = vsub.f32 %v570, %v819
        %v841 = vsub.f32 %v572, %v823
        %v842 = vsub.f32 %v576, %v819
        %v843 = vsub.f32 %v578, %v823
        %v844 = vsub.f32 %v582, %v819
        %v845 = vsub.f32 %v584, %v823
        %v846 = vsub.f32 %v588, %v819
        %v847 = vsub.f32 %v590, %v823
        %v848 = vsub.f32 %v594, %v819
        %v849 = vsub.f32 %v596, %v823
        %v850 = vsub.f32 %v600, %v819
        %v851 = vsub.f32 %v602, %v823
        %v852 = vsub.f32 %v606, %v819
        %v853 = vsub.f32 %v608, %v823
        %v854 = vsub.f32 %v612, %v819
        %v855 = vsub.f32 %v614, %v823
        %v856 = vsub.f32 %v618, %v819
        %v857 = vsub.f32 %v620, %v823
        %v858 = vsub.f32 %v624, %v819
        %v859 = vsub.f32 %v626, %v823
        %v860 = vsub.f32 %v630, %v819
        %v861 = vsub.f32 %v632, %v823
        %v862 = vsub.f32 %v636, %v819
        %v863 = vsub.f32 %v638, %v823
        %v864 = vsub.f32 %v642, %v819
        %v865 = vsub.f32 %v644, %v823
        %v866 = vsub.f32 %v648, %v819
        %v867 = vsub.f32 %v650, %v823
        %v868 = vsub.f32 %v654, %v819
        %v869 = vsub.f32 %v656, %v823
        %v870 = vsub.f32 %v660, %v819
        %v871 = vsub.f32 %v662, %v823
        %v872 = vsub.f32 %v666, %v819
        %v873 = vsub.f32 %v668, %v823
        %v874 = vsub.f32 %v672, %v819
        %v875 = vsub.f32 %v674, %v823
        %v876 = vsub.f32 %v678, %v819
        %v877 = vsub.f32 %v680, %v823
        %v878 = vsub.f32 %v684, %v819
        %v879 = vsub.f32 %v686, %v823
        %v880 = vsub.f32 %v690, %v819
        %v881 = vsub.f32 %v692, %v823
        %v882 = vsub.f32 %v696, %v819
        %v883 = vsub.f32 %v698, %v823
        %v884 = vsub.f32 %v702, %v819
        %v885 = vsub.f32 %v704, %v823
        %v886 = vsub.f32 %v708, %v819
        %v887 = vsub.f32 %v710, %v823
        %v888 = vsub.f32 %v714, %v819
        %v889 = vsub.f32 %v716, %v823
        %v890 = vmul.f32 %v826, 1.442695
        %v891 = vpow.pop %v890
        %v892 = vmul.f32 %v827, 1.442695
        %v893 = vpow.pop %v892
        %v894 = vmul.f32 %v828, 1.442695
        %v895 = vpow.pop %v894
        %v896 = vmul.f32 %v829, 1.442695
        %v897 = vpow.pop %v896
        %v898 = vmul.f32 %v830, 1.442695
        %v899 = vpow.pop %v898
        %v900 = vmul.f32 %v831, 1.442695
        %v901 = vpow.pop %v900
        %v902 = vmul.f32 %v832, 1.442695
        %v903 = vpow.pop %v902
        %v904 = vmul.f32 %v833, 1.442695
        %v905 = vpow.pop %v904
        %v906 = vmul.f32 %v834, 1.442695
        %v907 = vpow.pop %v906
        %v908 = vmul.f32 %v835, 1.442695
        %v909 = vpow.pop %v908
        %v910 = vmul.f32 %v836, 1.442695
        %v911 = vpow.pop %v910
        %v912 = vmul.f32 %v837, 1.442695
        %v913 = vpow.pop %v912
        %v914 = vmul.f32 %v838, 1.442695
        %v915 = vpow.pop %v914
        %v916 = vmul.f32 %v839, 1.442695
        %v917 = vpow.pop %v916
        %v918 = vmul.f32 %v840, 1.442695
        %v919 = vpow.pop %v918
        %v920 = vmul.f32 %v841, 1.442695
        %v921 = vpow.pop %v920
        %v922 = vmul.f32 %v842, 1.442695
        %v923 = vpow.pop %v922
        %v924 = vmul.f32 %v843, 1.442695
        %v925 = vpow.pop %v924
        %v926 = vmul.f32 %v844, 1.442695
        %v927 = vpow.pop %v926
        %v928 = vmul.f32 %v845, 1.442695
        %v929 = vpow.pop %v928
        %v930 = vmul.f32 %v846, 1.442695
        %v931 = vpow.pop %v930
        %v932 = vmul.f32 %v847, 1.442695
        %v933 = vpow.pop %v932
        %v934 = vmul.f32 %v848, 1.442695
        %v935 = vpow.pop %v934
        %v936 = vmul.f32 %v849, 1.442695
        %v937 = vpow.pop %v936
        %v938 = vmul.f32 %v850, 1.442695
        %v939 = vpow.pop %v938
        %v940 = vmul.f32 %v851, 1.442695
        %v941 = vpow.pop %v940
        %v942 = vmul.f32 %v852, 1.442695
        %v943 = vpow.pop %v942
        %v944 = vmul.f32 %v853, 1.442695
        %v945 = vpow.pop %v944
        %v946 = vmul.f32 %v854, 1.442695
        %v947 = vpow.pop %v946
        %v948 = vmul.f32 %v855, 1.442695
        %v949 = vpow.pop %v948
        %v950 = vmul.f32 %v856, 1.442695
        %v951 = vpow.pop %v950
        %v952 = vmul.f32 %v857, 1.442695
        %v953 = vpow.pop %v952
        %v954 = vmul.f32 %v858, 1.442695
        %v955 = vpow.pop %v954
        %v956 = vmul.f32 %v859, 1.442695
        %v957 = vpow.pop %v956
        %v958 = vmul.f32 %v860, 1.442695
        %v959 = vpow.pop %v958
        %v960 = vmul.f32 %v861, 1.442695
        %v961 = vpow.pop %v960
        %v962 = vmul.f32 %v862, 1.442695
        %v963 = vpow.pop %v962
        %v964 = vmul.f32 %v863, 1.442695
        %v965 = vpow.pop %v964
        %v966 = vmul.f32 %v864, 1.442695
        %v967 = vpow.pop %v966
        %v968 = vmul.f32 %v865, 1.442695
        %v969 = vpow.pop %v968
        %v970 = vmul.f32 %v866, 1.442695
        %v971 = vpow.pop %v970
        %v972 = vmul.f32 %v867, 1.442695
        %v973 = vpow.pop %v972
        %v974 = vmul.f32 %v868, 1.442695
        %v975 = vpow.pop %v974
        %v976 = vmul.f32 %v869, 1.442695
        %v977 = vpow.pop %v976
        %v978 = vmul.f32 %v870, 1.442695
        %v979 = vpow.pop %v978
        %v980 = vmul.f32 %v871, 1.442695
        %v981 = vpow.pop %v980
        %v982 = vmul.f32 %v872, 1.442695
        %v983 = vpow.pop %v982
        %v984 = vmul.f32 %v873, 1.442695
        %v985 = vpow.pop %v984
        %v986 = vmul.f32 %v874, 1.442695
        %v987 = vpow.pop %v986
        %v988 = vmul.f32 %v875, 1.442695
        %v989 = vpow.pop %v988
        %v990 = vmul.f32 %v876, 1.442695
        %v991 = vpow.pop %v990
        %v992 = vmul.f32 %v877, 1.442695
        %v993 = vpow.pop %v992
        %v994 = vmul.f32 %v878, 1.442695
        %v995 = vpow.pop %v994
        %v996 = vmul.f32 %v879, 1.442695
        %v997 = vpow.pop %v996
        %v998 = vmul.f32 %v880, 1.442695
        %v999 = vpow.pop %v998
        %v1000 = vmul.f32 %v881, 1.442695
        %v1001 = vpow.pop %v1000
        %v1002 = vmul.f32 %v882, 1.442695
        %v1003 = vpow.pop %v1002
        %v1004 = vmul.f32 %v883, 1.442695
        %v1005 = vpow.pop %v1004
        %v1006 = vmul.f32 %v884, 1.442695
        %v1007 = vpow.pop %v1006
        %v1008 = vmul.f32 %v885, 1.442695
        %v1009 = vpow.pop %v1008
        %v1010 = vmul.f32 %v886, 1.442695
        %v1011 = vpow.pop %v1010
        %v1012 = vmul.f32 %v887, 1.442695
        %v1013 = vpow.pop %v1012
        %v1014 = vmul.f32 %v888, 1.442695
        %v1015 = vpow.pop %v1014
        %v1016 = vmul.f32 %v889, 1.442695
        %v1017 = vpow.pop %v1016
        %v1018 = vld [vmem:[#allocation3] sm:$0x3]
        %v1019 = vmul.f32 %v814, %v1018
        %v1020 = vadd.f32 %v891, %v895
        %v1021 = vadd.f32 %v1020, %v899
        %v1022 = vadd.f32 %v1021, %v903
        %v1023 = vadd.f32 %v1022, %v907
        %v1024 = vadd.f32 %v1023, %v911
        %v1025 = vadd.f32 %v1024, %v915
        %v1026 = vadd.f32 %v1025, %v919
        %v1027 = vadd.f32 %v1026, %v923
        %v1028 = vadd.f32 %v1027, %v927
        %v1029 = vadd.f32 %v1028, %v931
        %v1030 = vadd.f32 %v1029, %v935
        %v1031 = vadd.f32 %v1030, %v939
        %v1032 = vadd.f32 %v1031, %v943
        %v1033 = vadd.f32 %v1032, %v947
        %v1034 = vadd.f32 %v1033, %v951
        %v1035 = vadd.f32 %v1034, %v955
        %v1036 = vadd.f32 %v1035, %v959
        %v1037 = vadd.f32 %v1036, %v963
        %v1038 = vadd.f32 %v1037, %v967
        %v1039 = vadd.f32 %v1038, %v971
        %v1040 = vadd.f32 %v1039, %v975
        %v1041 = vadd.f32 %v1040, %v979
        %v1042 = vadd.f32 %v1041, %v983
        %v1043 = vadd.f32 %v1042, %v987
        %v1044 = vadd.f32 %v1043, %v991
        %v1045 = vadd.f32 %v1044, %v995
        %v1046 = vadd.f32 %v1045, %v999
        %v1047 = vadd.f32 %v1046, %v1003
        %v1048 = vadd.f32 %v1047, %v1007
        %v1049 = vadd.f32 %v1048, %v1011
        %v1050 = vadd.f32 %v1049, %v1015
        %v1051 = vrot.slane %v1050, 4
        %v1052 = vadd.f32 %v1050, %v1051
        %v1053 = vrot.slane %v1052, 2
        %v1054 = vadd.f32 %v1052, %v1053
        %v1055 = vrot.slane %v1054, 1
        %v1056 = vadd.f32 %v1054, %v1055
        %v1057 = vadd.f32 %v893, %v897
        %v1058 = vadd.f32 %v1057, %v901
        %v1059 = vadd.f32 %v1058, %v905
        %v1060 = vadd.f32 %v1059, %v909
        %v1061 = vadd.f32 %v1060, %v913
        %v1062 = vadd.f32 %v1061, %v917
        %v1063 = vadd.f32 %v1062, %v921
        %v1064 = vadd.f32 %v1063, %v925
        %v1065 = vadd.f32 %v1064, %v929
        %v1066 = vadd.f32 %v1065, %v933
        %v1067 = vadd.f32 %v1066, %v937
        %v1068 = vadd.f32 %v1067, %v941
        %v1069 = vadd.f32 %v1068, %v945
        %v1070 = vadd.f32 %v1069, %v949
        %v1071 = vadd.f32 %v1070, %v953
        %v1072 = vadd.f32 %v1071, %v957
        %v1073 = vadd.f32 %v1072, %v961
        %v1074 = vadd.f32 %v1073, %v965
        %v1075 = vadd.f32 %v1074, %v969
        %v1076 = vadd.f32 %v1075, %v973
        %v1077 = vadd.f32 %v1076, %v977
        %v1078 = vadd.f32 %v1077, %v981
        %v1079 = vadd.f32 %v1078, %v985
        %v1080 = vadd.f32 %v1079, %v989
        %v1081 = vadd.f32 %v1080, %v993
        %v1082 = vadd.f32 %v1081, %v997
        %v1083 = vadd.f32 %v1082, %v1001
        %v1084 = vadd.f32 %v1083, %v1005
        %v1085 = vadd.f32 %v1084, %v1009
        %v1086 = vadd.f32 %v1085, %v1013
        %v1087 = vadd.f32 %v1086, %v1017
        %v1088 = vrot.slane %v1087, 4
        %v1089 = vadd.f32 %v1087, %v1088
        %v1090 = vrot.slane %v1089, 2
        %v1091 = vadd.f32 %v1089, %v1090
        %v1092 = vrot.slane %v1091, 1
        %v1093 = vadd.f32 %v1091, %v1092
        %v1096 = vcombine.low %v1056, %v1093
        %v1098 = vunpack.c.l.s4 1966171168
        %v1099 = vunpack.c.0.s8 %v1098
        %v1100 = vlaneseq
        %v1101 = vshrl.u32 %v1100, 7
        %v1102 = vsub.s32 %v1099, %v1101
        %v1103 = vrot.slane %v1096, %v1102
        %v1105 = vunpack.c.l.s4 1966171168
        %v1106 = vunpack.c.0.s8 %v1105
        %v1107 = vlaneseq
        %v1108 = vshrl.u32 %v1107, 7
        %v1109 = vsub.s32 %v1106, %v1108
        %v1110 = vrot.slane %v1103, %v1109
        %v1112 = vadd.f32 %v1019, %v1110
        %v1113 = vlaneseq
        %vm1114 = vcmp.ge.s32.totalorder %v1113, 0
        %vm1115 = vcmp.lt.s32.totalorder %v1113, 256
        %vm1116 = vmand %vm1114, %vm1115
        %1117 = vst.msk [vmem:[#allocation3] sm:$0x3] %vm1116, %v1112
        %v1118 = vld [vmem:[#allocation4] sm:$0xff]
        %v1119 = vld [vmem:[#allocation4 + $0x8] sm:$0xff]
        %v1121 = vlaneseq
        %v1122 = vshrl.u32 %v1121, 7
        %v1123 = vsub.s32 0, %v1122
        %v1124 = vrot.slane %v814, %v1123
        %v1125 = vlaneseq
        %v1126 = vshrl.u32 %v1125, 7
        %v1127 = vsub.s32 1, %v1126
        %v1128 = vrot.slane %v814, %v1127
        %v1131 = vmul.f32 %v1124, %v1118
        %v1132 = vmul.f32 %v1128, %v1119
        %1133 = vmatprep.subr.mxu0 %v893
        %1134 = vmatpush1.msra.mxu0 %v891
        %1135 = vmatprep.subr.mxu0 %v897
        %1136 = vmatpush1.msra.mxu0 %v895
        %1137 = vmatprep.subr.mxu0 %v901
        %1138 = vmatpush1.msra.mxu0 %v899
        %1139 = vmatprep.subr.mxu0 %v905
        %1140 = vmatpush1.msra.mxu0 %v903
        %1141 = vmatprep.subr.mxu0 %v909
        %1142 = vmatpush1.msra.mxu0 %v907
        %1143 = vmatprep.subr.mxu0 %v913
        %1144 = vmatpush1.msra.mxu0 %v911
        %1145 = vmatprep.subr.mxu0 %v917
        %1146 = vmatpush1.msra.mxu0 %v915
        %1147 = vmatprep.subr.mxu0 %v921
        %1148 = vmatpush1.msra.mxu0 %v919
        %1149 = vmatprep.subr.mxu0 %v925
        %1150 = vmatpush1.msra.mxu0 %v923
        %1151 = vmatprep.subr.mxu0 %v929
        %1152 = vmatpush1.msra.mxu0 %v927
        %1153 = vmatprep.subr.mxu0 %v933
        %1154 = vmatpush1.msra.mxu0 %v931
        %1155 = vmatprep.subr.mxu0 %v937
        %1156 = vmatpush1.msra.mxu0 %v935
        %1157 = vmatprep.subr.mxu0 %v941
        %1158 = vmatpush1.msra.mxu0 %v939
        %1159 = vmatprep.subr.mxu0 %v945
        %1160 = vmatpush1.msra.mxu0 %v943
        %1161 = vmatprep.subr.mxu0 %v949
        %1162 = vmatpush1.msra.mxu0 %v947
        %1163 = vmatprep.subr.mxu0 %v953
        %1164 = vmatpush1.msra.mxu0 %v951
        %1165 = vmatprep.subr.mxu0 %v957
        %1166 = vmatpush1.msra.mxu0 %v955
        %1167 = vmatprep.subr.mxu0 %v961
        %1168 = vmatpush1.msra.mxu0 %v959
        %1169 = vmatprep.subr.mxu0 %v965
        %1170 = vmatpush1.msra.mxu0 %v963
        %1171 = vmatprep.subr.mxu0 %v969
        %1172 = vmatpush1.msra.mxu0 %v967
        %1173 = vmatprep.subr.mxu0 %v973
        %1174 = vmatpush1.msra.mxu0 %v971
        %1175 = vmatprep.subr.mxu0 %v977
        %1176 = vmatpush1.msra.mxu0 %v975
        %1177 = vmatprep.subr.mxu0 %v981
        %1178 = vmatpush1.msra.mxu0 %v979
        %1179 = vmatprep.subr.mxu0 %v985
        %1180 = vmatpush1.msra.mxu0 %v983
        %1181 = vmatprep.subr.mxu0 %v989
        %1182 = vmatpush1.msra.mxu0 %v987
        %1183 = vmatprep.subr.mxu0 %v993
        %1184 = vmatpush1.msra.mxu0 %v991
        %1185 = vmatprep.subr.mxu0 %v997
        %1186 = vmatpush1.msra.mxu0 %v995
        %1187 = vmatprep.subr.mxu0 %v1001
        %1188 = vmatpush1.msra.mxu0 %v999
        %1189 = vmatprep.subr.mxu0 %v1005
        %1190 = vmatpush1.msra.mxu0 %v1003
        %1191 = vmatprep.subr.mxu0 %v1009
        %1192 = vmatpush1.msra.mxu0 %v1007
        %1193 = vmatprep.subr.mxu0 %v1013
        %1194 = vmatpush1.msra.mxu0 %v1011
        %1195 = vmatprep.subr.mxu0 %v1017
        %1196 = vmatpush1.msra.mxu0 %v1015
        %1197 = vmatprep.mubr.f32.mxu0 %v299
        %1198 = vmatmul.mubr.f32.gmra.mrb[0].mxu0 %v298
        %v1199 = vpop.f32.mrb[0].mxu0
        %v1200 = vadd.f32 0.0, %v1199
        %v1201 = vpop.f32.mrb[0].mxu0
        %v1202 = vadd.f32 0.0, %v1201
        %1203 = vdwg.mxu0
        %v1204 = vadd.f32 %v1131, %v1200
        %v1205 = vadd.f32 %v1132, %v1202
        %1206 = vst [vmem:[#allocation4] sm:$0xff] %v1204
        %1207 = vst [vmem:[#allocation4 + $0x8] sm:$0xff] %v1205
        %1208 = vst.msk [vmem:[#allocation2] sm:$0x3] %vm1116, %v811
        // Predicated region
        $region49: #{tpu_custom_call.1} parent=35 // pred_check
          %p1209 = pneg %p284
        $region50: #{tpu_custom_call.1} parent=35 // pred_check_branch
          %1211 = sbr.rel (%p1209) target = $region52
        $region51: #{tpu_custom_call.1} parent=35 // pred_region
          %v1212 = vld [vmem:[#allocation4] sm:$0xff]
          %v1213 = vld [vmem:[#allocation4 + $0x8] sm:$0xff]
          %v1214 = vld [vmem:[#allocation3] sm:$0x3]
          %v1216 = vlaneseq
          %v1217 = vshrl.u32 %v1216, 7
          %v1218 = vsub.s32 0, %v1217
          %v1219 = vrot.slane %v1214, %v1218
          %v1220 = vlaneseq
          %v1221 = vshrl.u32 %v1220, 7
          %v1222 = vsub.s32 1, %v1221
          %v1223 = vrot.slane %v1214, %v1222
          %v1226 = vrcp.pop %v1219
          %v1227 = vmul.f32 %v1212, %v1226
          %v1228 = vrcp.pop %v1223
          %v1229 = vmul.f32 %v1213, %v1228
          %v1230 = vld [vmem:[%s2] sm:$0xff]
          %v1231 = vld [vmem:[%s3] sm:$0xff]
          %1233 = vset.pattern.permute.xlu0 0
          %1234 = vperm.xlu0 %1233, %v1231
          %v1235 = vpop.permute.xlu0 %1234
          %v1238 = vsel %vm364, %v1230, 0
          %1240 = vmatprep.subr.mxu0 %v1229
          %1241 = vmatpush1.msra.mxu0 %v1227
          %1242 = vmatprep.subr.mxu0 0.0
          %1243 = vmatpush1.msra.mxu0 0.0
          %1244 = vmatprep.subr.mxu0 0.0
          %1245 = vmatpush1.msra.mxu0 0.0
          %1246 = vmatprep.subr.mxu0 0.0
          %1247 = vmatpush1.msra.mxu0 0.0
          %1248 = vmatprep.subr.mxu0 0.0
          %1249 = vmatpush1.msra.mxu0 0.0
          %1250 = vmatprep.subr.mxu0 0.0
          %1251 = vmatpush1.msra.mxu0 0.0
          %1252 = vmatprep.subr.mxu0 0.0
          %1253 = vmatpush1.msra.mxu0 0.0
          %1254 = vmatprep.subr.mxu0 0.0
          %1255 = vmatpush1.msra.mxu0 0.0
          %1256 = vmatprep.subr.mxu0 0.0
          %1257 = vmatpush1.msra.mxu0 0.0
          %1258 = vmatprep.subr.mxu0 0.0
          %1259 = vmatpush1.msra.mxu0 0.0
          %1260 = vmatprep.subr.mxu0 0.0
          %1261 = vmatpush1.msra.mxu0 0.0
          %1262 = vmatprep.subr.mxu0 0.0
          %1263 = vmatpush1.msra.mxu0 0.0
          %1264 = vmatprep.subr.mxu0 0.0
          %1265 = vmatpush1.msra.mxu0 0.0
          %1266 = vmatprep.subr.mxu0 0.0
          %1267 = vmatpush1.msra.mxu0 0.0
          %1268 = vmatprep.subr.mxu0 0.0
          %1269 = vmatpush1.msra.mxu0 0.0
          %1270 = vmatprep.subr.mxu0 0.0
          %1271 = vmatpush1.msra.mxu0 0.0
          %1272 = vmatprep.subr.mxu0 0.0
          %1273 = vmatpush1.msra.mxu0 0.0
          %1274 = vmatprep.subr.mxu0 0.0
          %1275 = vmatpush1.msra.mxu0 0.0
          %1276 = vmatprep.subr.mxu0 0.0
          %1277 = vmatpush1.msra.mxu0 0.0
          %1278 = vmatprep.subr.mxu0 0.0
          %1279 = vmatpush1.msra.mxu0 0.0
          %1280 = vmatprep.subr.mxu0 0.0
          %1281 = vmatpush1.msra.mxu0 0.0
          %1282 = vmatprep.subr.mxu0 0.0
          %1283 = vmatpush1.msra.mxu0 0.0
          %1284 = vmatprep.subr.mxu0 0.0
          %1285 = vmatpush1.msra.mxu0 0.0
          %1286 = vmatprep.subr.mxu0 0.0
          %1287 = vmatpush1.msra.mxu0 0.0
          %1288 = vmatprep.subr.mxu0 0.0
          %1289 = vmatpush1.msra.mxu0 0.0
          %1290 = vmatprep.subr.mxu0 0.0
          %1291 = vmatpush1.msra.mxu0 0.0
          %1292 = vmatprep.subr.mxu0 0.0
          %1293 = vmatpush1.msra.mxu0 0.0
          %1294 = vmatprep.subr.mxu0 0.0
          %1295 = vmatpush1.msra.mxu0 0.0
          %1296 = vmatprep.subr.mxu0 0.0
          %1297 = vmatpush1.msra.mxu0 0.0
          %1298 = vmatprep.subr.mxu0 0.0
          %1299 = vmatpush1.msra.mxu0 0.0
          %1300 = vmatprep.subr.mxu0 0.0
          %1301 = vmatpush1.msra.mxu0 0.0
          %1302 = vmatprep.subr.mxu0 0.0
          %1303 = vmatpush1.msra.mxu0 0.0
          %1304 = vmatprep.mubr.f32.mxu0 0.0
          %1305 = vmatmul.mubr.f32.gmra.mrb[0].mxu0 %v1238
          %v1306 = vpop.f32.mrb[0].mxu0
          %v1307 = vadd.f32 %v1235, %v1306
          %v1308 = vpop.f32.mrb[0].mxu0
          %v1309 = vadd.f32 %v1235, %v1308
          %1310 = vdwg.mxu0
          %v1311 = vadd.f32 %v1307, %v296
          %v1312 = vadd.f32 %v1309, %v297
          %1313 = vst [vmem:[%s280] sm:$0xff] %v1311
          %1314 = vst [vmem:[%s280 + $0x8] sm:$0xff] %v1312
        $region52: #{tpu_custom_call.1} parent=35 // pred_fallthru
          _
        %s1315 = sand.u32 %s151, 1
        %s1316 = scalar_lea.sflag [#allocation7], %s1315
        %s1317 = sand.u32 %s151, 1
        %s1318 = smul.addr %s1317, 16
        %s1319 = scalar_lea.vmem [#allocation10], %s1318
        // Predicated region
        $region53: #{tpu_custom_call.1} parent=35 // pred_check
          %p1320 = pneg %p161
        $region54: #{tpu_custom_call.1} parent=35 // pred_check_branch
          %1322 = sbr.rel (%p1320) target = $region56
        $region55: #{tpu_custom_call.1} parent=35 // pred_region
          %s1323 = smul.u32 2, %s30
          %s1325 = ssub.s32 256, 256
          %1326 = vsyncadd %s1316, %s1325
          %s1327 = smul.addr %s29, 2
          %s1328 = sadd.s32 %s1323, %s1327
          %s1329 = smul.addr %s1328, 128
          %s1330 = scalar_lea.hbm %s4, %s1329
          %s1332 = sshll.u32 %s1319, 4
          %s1333 = int_to_ptr.vmem [resolvable:$true] %s1332
          %1335 = dma.vmem_to_hbm [thread:$0]  %s1333, 256, %s1330, %s1316
        $region56: #{tpu_custom_call.1} parent=35 // pred_fallthru
          _
      $region36: #{tpu_custom_call.1} parent=5 // pred_fallthru
        _
      %p1336 = scmp.le.s32.totalorder 2, %s19
      // Predicated region
      $region57: #{tpu_custom_call.1} parent=5 // pred_check
        %p1337 = pneg %p1336
      $region58: #{tpu_custom_call.1} parent=5 // pred_check_branch
        %1339 = sbr.rel (%p1337) target = $region60
      $region59: #{tpu_custom_call.1} parent=5 // pred_region
        %s1340 = ssub.s32 %s19, 2
        // Predicated region
        $region61: #{tpu_custom_call.1} parent=59 // pred_check
          %p1341 = pneg %p167
        $region62: #{tpu_custom_call.1} parent=59 // pred_check_branch
          %1343 = sbr.rel (%p1341) target = $region64
        $region63: #{tpu_custom_call.1} parent=59 // pred_region
          %s1344 = sand.u32 %s152, 1
          %s1345 = scalar_lea.sflag [#allocation7], %s1344
          %s1346 = sand.u32 %s152, 1
          %s1347 = smul.addr %s1346, 16
          %s1348 = scalar_lea.vmem [#allocation10], %s1347
          %1349 = dma.done %s1345, 256
        $region64: #{tpu_custom_call.1} parent=59 // pred_fallthru
          _
      $region60: #{tpu_custom_call.1} parent=5 // pred_fallthru
        _
    $region6: #{tpu_custom_call.1} parent=1 // loop_footer
      %s23 = sadd.s32 1, %s19
    $region7: #{tpu_custom_call.1} parent=1 // loop_footer_branch
      %18 = sbr.rel target = $region3
    $region8: #{tpu_custom_call.1} parent=1 // loop_exit
      _
    %1350 = vsyncpa [#allocation6], 1
    %s1351 = scalar_lea.sflag [#allocation6], 1
    %1352 = vsyncpa %s1351, 1
    %1353 = vsyncpa [#allocation9], 1
    %s1354 = scalar_lea.sflag [#allocation9], 1
    %1355 = vsyncpa %s1354, 1
    %1356 = vsyncpa [#allocation7], 1
    %s1357 = scalar_lea.sflag [#allocation7], 1
    %1358 = vsyncpa %s1357, 1

</llo_original>
